<compile_context>
chip_gen: v7x
topology: tpu7x:2x2x1
jax: 0.10.0
libtpu: 0.0.40
codegen_flags: <defaults>
</compile_context>

<pallas_src>
import functools

import jax
import jax.numpy as jnp
from jax.experimental import pallas as pl
from jax.experimental.pallas import tpu as pltpu


def _round_up(n: int, m: int) -> int:
    return ((n + m - 1) // m) * m


def _max_multi_logits_kernel(x_ref, w_ref, b_ref, o_ref, *, multiply, c_pad):
    """x_ref: (TB, H); w_ref: (H, M*Cp); b_ref: (1, M*Cp); o_ref: (TB, Cp)."""
    x = x_ref[...]
    w = w_ref[...]
    if x.dtype != w.dtype:                     # optional bf16 weights, f32 accum
        x = x.astype(w.dtype)
    # One fused MXU matmul over all (padded) class*multiply columns.
    logits = jnp.dot(x, w, preferred_element_type=jnp.float32)
    logits = logits + b_ref[...].astype(jnp.float32)
    # Max over the `multiply` replicas: lane-aligned static slices of width Cp
    # (Cp % 128 == 0 -> pure lane-block selects, no XLU shuffles, no copies).
    acc = logits[:, :c_pad]
    for m in range(1, multiply):
        acc = jnp.maximum(acc, logits[:, m * c_pad:(m + 1) * c_pad])
    o_ref[...] = acc.astype(o_ref.dtype)


def prepare_max_multi_logits_params(weight, bias, *, class_num, multiply,
                                     param_dtype=None):
    """One-time weight regroup; call at model init, NOT per forward.

    weight: (class_num*multiply, H), PyTorch Linear layout, row index c*M + m.
    bias:   (class_num*multiply,)

    Returns (w2, b2):
      w2: (H, M*Cp) with column m*Cp + c == weight[c*M + m, :], zero-padded in c.
      b2: (1, M*Cp) f32, matching column layout (zeros in padded columns).
    Cp = round_up(class_num, 128) so the kernel's output is lane-dense.
    """
    cm, h = weight.shape
    assert cm == class_num * multiply and bias.shape == (cm,)
    c_pad = _round_up(class_num, 128)

    w = weight.reshape(class_num, multiply, h)            # [c, m, h]
    w = jnp.transpose(w, (1, 0, 2))                       # [m, c, h]
    w = jnp.pad(w, ((0, 0), (0, c_pad - class_num), (0, 0)))
    w2 = jnp.transpose(w, (2, 0, 1)).reshape(h, multiply * c_pad)

    b = bias.reshape(class_num, multiply).T               # [m, c]
    b = jnp.pad(b, ((0, 0), (0, c_pad - class_num)))
    b2 = b.reshape(1, multiply * c_pad).astype(jnp.float32)

    if param_dtype is not None:                           # e.g. jnp.bfloat16
        w2 = w2.astype(param_dtype)
    return w2, b2


def max_multi_logits_apply(input_hidden_states, w2, b2, *, class_num, multiply,
                           block_b=256):
    """input_hidden_states: (B, S, H); w2/b2 from prepare_max_multi_logits_params."""
    B, S, H = input_hidden_states.shape
    c_pad = w2.shape[1] // multiply
    assert w2.shape == (H, multiply * c_pad) and b2.shape == (1, multiply * c_pad)
    assert c_pad % 128 == 0 and c_pad >= class_num

    out_dtype = input_hidden_states.dtype
    x_itemsize = jnp.dtype(input_hidden_states.dtype).itemsize
    o_itemsize = jnp.dtype(out_dtype).itemsize
    w_bytes = w2.size * jnp.dtype(w2.dtype).itemsize + b2.size * 4

    # Batch tile: start from block_b, never exceed the (8-rounded) batch, and
    # shrink until double-buffered x/out tiles + the f32 logits fit comfortably
    # next to the resident weight (<= ~16 MiB of per-step traffic).
    tb = max(8, min(_round_up(block_b, 8), _round_up(B, 8)))

    def _tile_bytes(t):
        return (2 * t * H * x_itemsize          # x tile, double-buffered
                + 2 * t * c_pad * o_itemsize    # out tile, double-buffered
                + t * multiply * c_pad * 4)     # f32 logits intermediate

    while tb > 8 and _tile_bytes(tb) > 16 * 1024 * 1024:
        tb //= 2
    tb = max(8, _round_up(tb, 8))

    # CLS-token selection.
    if H % 128 == 0:
        # Zero-copy: view (B, S, H) as (B, S*H) (free contiguous collapse); the
        # CLS token of row b is the leading H lanes, so the BlockSpec DMAs it
        # straight from the original buffer (no separate XLA slice kernel).
        x_in = input_hidden_states.reshape(B, S * H)
    else:
        # Fallback for lane-unfriendly H: materialize the small (B, H) CLS slice.
        x_in = input_hidden_states[:, 0, :]
    x_spec = pl.BlockSpec((tb, H), lambda i: (i, 0))

    # VMEM budget: resident weight + bias + per-step tiles.
    needed = w_bytes + _tile_bytes(tb)
    # NOTE: if `needed` approaches 64 MiB (v7x physical VMEM) the weight can no
    # longer stay resident and a class-dim grid axis should be added instead.
    # TODO(synk): add a second grid axis over M*Cp for very large class_num*H.
    vmem_limit = int(min(64 * 1024 * 1024, max(32 * 1024 * 1024, 2 * needed)))

    kernel = functools.partial(_max_multi_logits_kernel,
                               multiply=multiply, c_pad=c_pad)

    out = pl.pallas_call(
        kernel,
        out_shape=jax.ShapeDtypeStruct((B, c_pad), out_dtype),
        grid=(pl.cdiv(B, tb),),
        in_specs=[
            x_spec,
            pl.BlockSpec((H, multiply * c_pad), lambda i: (0, 0)),  # VMEM-resident
            pl.BlockSpec((1, multiply * c_pad), lambda i: (0, 0)),  # VMEM-resident
        ],
        out_specs=pl.BlockSpec((tb, c_pad), lambda i: (i, 0)),
        compiler_params=pltpu.CompilerParams(
            dimension_semantics=("parallel",),   # shard batch tiles across TCs
            vmem_limit_bytes=vmem_limit,
        ),
    )(x_in, w2, b2)

    return out[:, :class_num]


def max_multi_logits(input_hidden_states, weight, bias, *, class_num, multiply,
                     block_b=256, param_dtype=None):
    """Convenience one-shot wrapper. Prefer hoisting prepare_* to model init."""
    w2, b2 = prepare_max_multi_logits_params(
        weight, bias, class_num=class_num, multiply=multiply,
        param_dtype=param_dtype)
    return max_multi_logits_apply(
        input_hidden_states, w2, b2, class_num=class_num, multiply=multiply,
        block_b=block_b)


if __name__ == "__main__":
    def reference(x, weight, bias, class_num, multiply):
        cls = x[:, 0, :]
        logits = jnp.dot(cls, weight.T,
                         precision=jax.lax.Precision.HIGHEST) + bias
        return jnp.max(logits.reshape(x.shape[0], class_num, multiply), axis=-1)

    key = jax.random.PRNGKey(0)

    # Case 1: H multiple of 128 -> zero-copy CLS path; block_b=8 forces a real
    # multi-tile batch grid (2 steps, incl. a partial last tile).
    B, S, H, C, M = 10, 8, 128, 4, 3
    key, kx, kw, kb = jax.random.split(key, 4)
    x = jax.random.normal(kx, (B, S, H), dtype=jnp.float32)
    bound = 1.0 / (H ** 0.5)
    w = jax.random.uniform(kw, (C * M, H), minval=-bound, maxval=bound,
                           dtype=jnp.float32)
    b = jax.random.uniform(kb, (C * M,), minval=-bound, maxval=bound,
                           dtype=jnp.float32)
    w2, b2 = prepare_max_multi_logits_params(w, b, class_num=C, multiply=M)
    out = max_multi_logits_apply(x, w2, b2, class_num=C, multiply=M, block_b=8)
    out = jax.block_until_ready(out)
    ref = reference(x, w, b, C, M)
    assert out.shape == (B, C), out.shape
    assert jnp.allclose(out, ref, atol=1e-4, rtol=1e-4), (out, ref)

    # Case 2: small, lane-unfriendly H -> fallback CLS-slice path; single
    # (partial) batch tile; one-shot convenience wrapper.
    B, S, H, C, M = 2, 8, 32, 5, 2
    key, kx, kw, kb = jax.random.split(key, 4)
    x = jax.random.normal(kx, (B, S, H), dtype=jnp.float32)
    bound = 1.0 / (H ** 0.5)
    w = jax.random.uniform(kw, (C * M, H), minval=-bound, maxval=bound,
                           dtype=jnp.float32)
    b = jax.random.uniform(kb, (C * M,), minval=-bound, maxval=bound,
                           dtype=jnp.float32)
    out = max_multi_logits(x, w, b, class_num=C, multiply=M)
    out = jax.block_until_ready(out)
    ref = reference(x, w, b, C, M)
    assert out.shape == (B, C), out.shape
    assert jnp.allclose(out, ref, atol=1e-4, rtol=1e-4), (out, ref)

    # Case 3: multiply=1 degenerate case (plain Linear on the CLS token).
    B, S, H, C, M = 6, 4, 128, 7, 1
    key, kx, kw, kb = jax.random.split(key, 4)
    x = jax.random.normal(kx, (B, S, H), dtype=jnp.float32)
    bound = 1.0 / (H ** 0.5)
    w = jax.random.uniform(kw, (C * M, H), minval=-bound, maxval=bound,
                           dtype=jnp.float32)
    b = jax.random.uniform(kb, (C * M,), minval=-bound, maxval=bound,
                           dtype=jnp.float32)
    out = max_multi_logits(x, w, b, class_num=C, multiply=M)
    out = jax.block_until_ready(out)
    ref = reference(x, w, b, C, M)
    assert out.shape == (B, C), out.shape
    assert jnp.allclose(out, ref, atol=1e-4, rtol=1e-4), (out, ref)

    print("KERNEL_OK")
</pallas_src>

<mosaic_0001>
module attributes {stable_mosaic.version = 11 : i64} {
  func.func @_max_multi_logits_kernel(%arg0: i32, %arg1: memref<8x128xf32, #tpu.memory_space<vmem>>, %arg2: memref<128x384xf32, #tpu.memory_space<vmem>>, %arg3: memref<1x384xf32, #tpu.memory_space<vmem>>, %arg4: memref<8x128xf32, #tpu.memory_space<vmem>>) attributes {dimension_semantics = [#tpu.dimension_semantics<parallel>], iteration_bounds = array<i64: 2>, scalar_prefetch = 0 : i64, scratch_operands = 0 : i64, tpu.core_type = #tpu.core_type<tc>, window_params = [{transform_indices = @transform_0, window_bounds = array<i64: 8, 128>}, {pipeline_mode = #tpu.pipeline_mode<synchronous>, transform_indices = @transform_1, window_bounds = array<i64: 128, 384>}, {pipeline_mode = #tpu.pipeline_mode<synchronous>, transform_indices = @transform_2, window_bounds = array<i64: 1, 384>}, {transform_indices = @transform_3, window_bounds = array<i64: 8, 128>}]} {
    %c0 = arith.constant 0 : index
    %c0_0 = arith.constant 0 : index
    %0 = vector.load %arg1[%c0, %c0_0] : memref<8x128xf32, #tpu.memory_space<vmem>>, vector<8x128xf32>
    %c0_1 = arith.constant 0 : index
    %c0_2 = arith.constant 0 : index
    %1 = vector.load %arg2[%c0_1, %c0_2] : memref<128x384xf32, #tpu.memory_space<vmem>>, vector<128x384xf32>
    %cst = arith.constant dense<0.000000e+00> : vector<8x384xf32>
    %2 = tpu.matmul %0, %1, %cst {dimension_numbers = #tpu.dot_dimension_numbers<[1], [0], [0], [1], [0, 0, 1, 1], [], []>} : vector<8x128xf32>, vector<128x384xf32>, vector<8x384xf32> -> vector<8x384xf32>
    %c0_3 = arith.constant 0 : index
    %c0_4 = arith.constant 0 : index
    %3 = vector.load %arg3[%c0_3, %c0_4] : memref<1x384xf32, #tpu.memory_space<vmem>>, vector<1x384xf32>
    %4 = vector.broadcast %3 : vector<1x384xf32> to vector<8x384xf32>
    %5 = arith.addf %2, %4 : vector<8x384xf32>
    %6 = vector.extract_strided_slice %5 {offsets = [0, 0], sizes = [8, 128], strides = [1, 1]} : vector<8x384xf32> to vector<8x128xf32>
    %7 = vector.extract_strided_slice %5 {offsets = [0, 128], sizes = [8, 128], strides = [1, 1]} : vector<8x384xf32> to vector<8x128xf32>
    %8 = arith.maximumf %6, %7 : vector<8x128xf32>
    %9 = vector.extract_strided_slice %5 {offsets = [0, 256], sizes = [8, 128], strides = [1, 1]} : vector<8x384xf32> to vector<8x128xf32>
    %10 = arith.maximumf %8, %9 : vector<8x128xf32>
    %c0_5 = arith.constant 0 : index
    %c0_6 = arith.constant 0 : index
    %11 = vector.load %arg4[%c0_5, %c0_6] : memref<8x128xf32, #tpu.memory_space<vmem>>, vector<8x128xf32>
    tpu.vector_store %arg4[%c0_5, %c0_6], %10 {strides = array<i32>} : memref<8x128xf32, #tpu.memory_space<vmem>>, vector<8x128xf32>,
    return
  }
  func.func @transform_0(%arg0: i32) -> (i32, i32) {
    %c0_i32 = arith.constant 0 : i32
    %c0_i32_0 = arith.constant 0 : i32
    return %arg0, %c0_i32 : i32, i32
  }
  func.func @transform_1(%arg0: i32) -> (i32, i32) {
    %c0_i32 = arith.constant 0 : i32
    %c0_i32_0 = arith.constant 0 : i32
    %c0_i32_1 = arith.constant 0 : i32
    return %c0_i32, %c0_i32_0 : i32, i32
  }
  func.func @transform_2(%arg0: i32) -> (i32, i32) {
    %c0_i32 = arith.constant 0 : i32
    %c0_i32_0 = arith.constant 0 : i32
    %c0_i32_1 = arith.constant 0 : i32
    return %c0_i32, %c0_i32_0 : i32, i32
  }
  func.func @transform_3(%arg0: i32) -> (i32, i32) {
    %c0_i32 = arith.constant 0 : i32
    %c0_i32_0 = arith.constant 0 : i32
    return %arg0, %c0_i32 : i32, i32
  }
}

</mosaic_0001>

<llo_original>
// kernel: tpu_custom_call.1
$region0: #{tpu_custom_call.1}
  #allocation0 [shape = 'u32[]', space=smem, size = 0x4, offset = 0x4, fixed_abs, tag = 'smem constant byte address 0x4 - core index']
  #allocation1 [shape = 'u32[144,128]{1,0:T(1,128)}', space=vmem, size = 0x12000, scoped, tag = 'internal scratch']
  %s0 = inlined_call_operand.hbm [shape: f32[10,1024], index: 0, kind: input, shape index: {}]
  %s1 = inlined_call_operand.hbm [shape: f32[128,384], index: 1, kind: input, shape index: {}]
  %s2 = inlined_call_operand.vmem [shape: f32[1,384], index: 2, kind: input, shape index: {}]
  %s3 = inlined_call_operand.hbm [shape: f32[10,128], index: 3, kind: output, shape index: {}]
  %s4 = sld [smem:[#allocation0]]
  $region53: #{tpu_custom_call.1} parent=0
    _
  %s6 = ssub.s32 1, %s4
  %s7 = scalar_select 0, %s6, %s4
  $region1: #{tpu_custom_call.1} parent=0
    #allocation2 [shape = 'u8[8192]{0}', space=vmem, size = 0x2000, scoped, tag = 'input window, operand 0']
    #allocation3 [shape = 's32[2]{0}', space=sflag, size = 0x8, scoped, tag = 'scoped memory for tpu_custom_call.1']
    #allocation4 [shape = 's32[2]{0}', space=sflag, size = 0x8, scoped, tag = 'scoped memory for tpu_custom_call.1']
    #allocation5 [shape = 'u8[196608]{0}', space=vmem, size = 0x30000, scoped, tag = 'input window, operand 1, single buffered']
    #allocation6 [shape = 's32[1]{0}', space=sflag, size = 0x4, scoped, tag = 'scoped memory for tpu_custom_call.1']
    #allocation7 [shape = 'u8[8192]{0}', space=vmem, size = 0x2000, scoped, tag = 'output window, operand 0']
    %8 = vsyncpa [#allocation3], 0
    %s9 = scalar_lea.sflag [#allocation3], 1
    %10 = vsyncpa %s9, 0
    %11 = vsyncpa [#allocation6], 0
    %12 = vsyncpa [#allocation4], 0
    %s13 = scalar_lea.sflag [#allocation4], 1
    %14 = vsyncpa %s13, 0
    loop: start=0, step=1, limit=4
    $region2: #{tpu_custom_call.1} parent=1 // loop_pre_header
      _
    $region3: #{tpu_custom_call.1} parent=1 // loop_header
      %s16 = sphi 0, %s20
      %p17 = scmp.ge.s32.totalorder %s16, 4
      %s26 = sphi 0, %s28
      %s29 = sphi 0, %s26
      %s30 = sphi 0, %s29
      %s46 = sphi 0, %s30
      %s50 = sphi 0, %s50
      %s52 = sphi 0, %s50
      %s53 = sphi 0, %s52
      %s67 = sphi 0, %s53
      %s71 = sphi 0, %s71
      %s73 = sphi 0, %s71
      %s74 = sphi 0, %s73
      %s88 = sphi 0, %s74
      %s94 = sphi 0, %s96
      %s97 = sphi 0, %s94
      %s98 = sphi 0, %s97
      %s114 = sphi 0, %s98
    $region4: #{tpu_custom_call.1} parent=1 // loop_header_branch
      %19 = sbr.rel (%p17) target = $region8
    $region5: #{tpu_custom_call.1} parent=1 // loop_body
      %s21 = ssub.s32 %s16, 1
      %s22 = ssub.s32 %s16, 2
      %s23 = sadd.s32 %s16, 1
      %s24 = ssub.s32 %s16, %s23
      %p25 = scmp.eq.s32.totalorder %s24, 0
      %s27 = sadd.s32 %s26, 1
      %s28 = scalar_select %p25, %s26, %s27
      %p31 = pneg %p25
      %p32 = scmp.eq.s32.totalorder %s16, 1
      %p33 = por %p31, %p32
      %p34 = scmp.ne.s32.totalorder %s26, %s29
      %p35 = scmp.eq.s32.totalorder %s16, 0
      %p36 = por %p34, %p35
      %p37 = scmp.ne.s32.totalorder %s26, %s29
      %p38 = scmp.eq.s32.totalorder %s21, 1
      %p39 = por %p37, %p38
      %p40 = scmp.ne.s32.totalorder %s29, %s30
      %p41 = scmp.eq.s32.totalorder %s21, 0
      %p42 = por %p40, %p41
      %p43 = scmp.ne.s32.totalorder %s29, %s30
      %p44 = scmp.eq.s32.totalorder %s22, 1
      %p45 = por %p43, %p44
      %p47 = scmp.ne.s32.totalorder %s30, %s46
      %p48 = scmp.eq.s32.totalorder %s22, 0
      %p49 = por %p47, %p48
      %s51 = sadd.s32 %s50, 1
      %p54 = scmp.eq.s32.totalorder %s16, 1
      %p55 = scmp.ne.s32.totalorder %s50, %s52
      %p56 = scmp.eq.s32.totalorder %s16, 0
      %p57 = por %p55, %p56
      %p58 = scmp.ne.s32.totalorder %s50, %s52
      %p59 = scmp.eq.s32.totalorder %s21, 1
      %p60 = por %p58, %p59
      %p61 = scmp.ne.s32.totalorder %s52, %s53
      %p62 = scmp.eq.s32.totalorder %s21, 0
      %p63 = por %p61, %p62
      %p64 = scmp.ne.s32.totalorder %s52, %s53
      %p65 = scmp.eq.s32.totalorder %s22, 1
      %p66 = por %p64, %p65
      %p68 = scmp.ne.s32.totalorder %s53, %s67
      %p69 = scmp.eq.s32.totalorder %s22, 0
      %p70 = por %p68, %p69
      %s72 = sadd.s32 %s71, 1
      %p75 = scmp.eq.s32.totalorder %s16, 1
      %p76 = scmp.ne.s32.totalorder %s71, %s73
      %p77 = scmp.eq.s32.totalorder %s16, 0
      %p78 = por %p76, %p77
      %p79 = scmp.ne.s32.totalorder %s71, %s73
      %p80 = scmp.eq.s32.totalorder %s21, 1
      %p81 = por %p79, %p80
      %p82 = scmp.ne.s32.totalorder %s73, %s74
      %p83 = scmp.eq.s32.totalorder %s21, 0
      %p84 = por %p82, %p83
      %p85 = scmp.ne.s32.totalorder %s73, %s74
      %p86 = scmp.eq.s32.totalorder %s22, 1
      %p87 = por %p85, %p86
      %p89 = scmp.ne.s32.totalorder %s74, %s88
      %p90 = scmp.eq.s32.totalorder %s22, 0
      %p91 = por %p89, %p90
      %s92 = ssub.s32 %s16, %s23
      %p93 = scmp.eq.s32.totalorder %s92, 0
      %s95 = sadd.s32 %s94, 1
      %s96 = scalar_select %p93, %s94, %s95
      %p99 = pneg %p93
      %p100 = scmp.eq.s32.totalorder %s16, 1
      %p101 = por %p99, %p100
      %p102 = scmp.ne.s32.totalorder %s94, %s97
      %p103 = scmp.eq.s32.totalorder %s16, 0
      %p104 = por %p102, %p103
      %p105 = scmp.ne.s32.totalorder %s94, %s97
      %p106 = scmp.eq.s32.totalorder %s21, 1
      %p107 = por %p105, %p106
      %p108 = scmp.ne.s32.totalorder %s97, %s98
      %p109 = scmp.eq.s32.totalorder %s21, 0
      %p110 = por %p108, %p109
      %p111 = scmp.ne.s32.totalorder %s97, %s98
      %p112 = scmp.eq.s32.totalorder %s22, 1
      %p113 = por %p111, %p112
      %p115 = scmp.ne.s32.totalorder %s98, %s114
      %p116 = scmp.eq.s32.totalorder %s22, 0
      %p117 = por %p115, %p116
      %p118 = scmp.le.s32.totalorder 1, %s16
      %p119 = scmp.lt.s32.totalorder %s16, 3
      %p120 = pnand %p118, %p119
      %p121 = pneg %p120
      // Predicated region
      $region9: #{tpu_custom_call.1} parent=5 // pred_check
        _
      $region10: #{tpu_custom_call.1} parent=5 // pred_check_branch
        %123 = sbr.rel (%p120) target = $region12
      $region11: #{tpu_custom_call.1} parent=5 // pred_region
        %s124 = ssub.s32 %s16, 1
        // Predicated region
        $region13: #{tpu_custom_call.1} parent=11 // pred_check
          %p125 = pneg %p63
        $region14: #{tpu_custom_call.1} parent=11 // pred_check_branch
          %127 = sbr.rel (%p125) target = $region16
        $region15: #{tpu_custom_call.1} parent=11 // pred_region
          %s129 = ssub.s32 6144, 6144
          %130 = vsyncadd [#allocation6], %s129
          %s131 = sshll.u32 [#allocation5], 4
          %s132 = int_to_ptr.vmem [resolvable:$true] %s131
          %137 = dma.hbm_to_vmem [thread:$0]  %s1, 6144, %s132, [#allocation6], 384, 384, 24
        $region16: #{tpu_custom_call.1} parent=11 // pred_fallthru
          _
        // Predicated region
        $region17: #{tpu_custom_call.1} parent=11 // pred_check
          %p138 = pneg %p84
        $region18: #{tpu_custom_call.1} parent=11 // pred_check_branch
          %140 = sbr.rel (%p138) target = $region20
        $region19: #{tpu_custom_call.1} parent=11 // pred_region
          _
        $region20: #{tpu_custom_call.1} parent=11 // pred_fallthru
          _
      $region12: #{tpu_custom_call.1} parent=5 // pred_fallthru
        _
      %p141 = scmp.lt.s32.totalorder %s16, 2
      // Predicated region
      $region21: #{tpu_custom_call.1} parent=5 // pred_check
        %p142 = pneg %p141
      $region22: #{tpu_custom_call.1} parent=5 // pred_check_branch
        %144 = sbr.rel (%p142) target = $region24
      $region23: #{tpu_custom_call.1} parent=5 // pred_region
        // Predicated region
        $region25: #{tpu_custom_call.1} parent=23 // pred_check
          %p145 = pneg %p36
        $region26: #{tpu_custom_call.1} parent=23 // pred_check_branch
          %147 = sbr.rel (%p145) target = $region28
        $region27: #{tpu_custom_call.1} parent=23 // pred_region
          %s148 = sand.u32 %s26, 1
          %s149 = scalar_lea.sflag [#allocation3], %s148
          %s150 = sand.u32 %s26, 1
          %s151 = smul.addr %s150, 8
          %s152 = scalar_lea.vmem [#allocation2], %s151
          %s154 = ssub.s32 128, 128
          %155 = vsyncadd %s149, %s154
          %s156 = smul.addr %s16, 8
          %s157 = smul.addr %s156, 128
          %s158 = scalar_lea.hbm %s0, %s157
          %s160 = sshll.u32 %s152, 4
          %s161 = int_to_ptr.vmem [resolvable:$true] %s160
          %163 = dma.hbm_to_vmem [thread:$0]  %s158, 128, %s161, %s149
        $region28: #{tpu_custom_call.1} parent=23 // pred_fallthru
          _
      $region24: #{tpu_custom_call.1} parent=5 // pred_fallthru
        _
      %p164 = scmp.le.s32.totalorder 1, %s16
      %p165 = scmp.lt.s32.totalorder %s16, 3
      %p166 = pnand %p164, %p165
      %p167 = pneg %p166
      // Predicated region
      $region29: #{tpu_custom_call.1} parent=5 // pred_check
        _
      $region30: #{tpu_custom_call.1} parent=5 // pred_check_branch
        %169 = sbr.rel (%p166) target = $region32
      $region31: #{tpu_custom_call.1} parent=5 // pred_region
        %s170 = ssub.s32 %s16, 1
        %s171 = sand.u32 %s29, 1
        %s172 = scalar_lea.sflag [#allocation3], %s171
        %s173 = sand.u32 %s29, 1
        %s174 = smul.addr %s173, 8
        %s175 = scalar_lea.vmem [#allocation2], %s174
        // Predicated region
        $region33: #{tpu_custom_call.1} parent=31 // pred_check
          %p176 = pneg %p42
        $region34: #{tpu_custom_call.1} parent=31 // pred_check_branch
          %178 = sbr.rel (%p176) target = $region36
        $region35: #{tpu_custom_call.1} parent=31 // pred_region
          %179 = dma.done %s172, 128
        $region36: #{tpu_custom_call.1} parent=31 // pred_fallthru
          _
        // Predicated region
        $region37: #{tpu_custom_call.1} parent=31 // pred_check
          %p180 = pneg %p63
        $region38: #{tpu_custom_call.1} parent=31 // pred_check_branch
          %182 = sbr.rel (%p180) target = $region40
        $region39: #{tpu_custom_call.1} parent=31 // pred_region
          %183 = dma.done [#allocation6], 6144
        $region40: #{tpu_custom_call.1} parent=31 // pred_fallthru
          _
        %s184 = sand.u32 %s29, 1
        %s185 = scalar_lea.sflag [#allocation3], %s184
        %s186 = sand.u32 %s29, 1
        %s187 = smul.addr %s186, 8
        %s188 = scalar_lea.vmem [#allocation2], %s187
        %p189 = pneg %p42
        %p190 = pneg %p39
        %p191 = pneg %p63
        %p192 = pneg %p60
        %p193 = pneg %p84
        %p194 = pneg %p81
        %p195 = pneg %p110
        %p196 = pneg %p107
        %s197 = sand.u32 %s97, 1
        %s198 = scalar_lea.sflag [#allocation4], %s197
        %s199 = sand.u32 %s97, 1
        %s200 = smul.addr %s199, 8
        %s201 = scalar_lea.vmem [#allocation7], %s200
        %v202 = vld [vmem:[%s175] sm:$0xff]
        %v203 = vld [vmem:[#allocation5] sm:$0xff]
        %v204 = vld [vmem:[#allocation5 + $0x8] sm:$0xff]
        %v205 = vld [vmem:[#allocation5 + $0x10] sm:$0xff]
        %v206 = vld [vmem:[#allocation5 + $0x18] sm:$0xff]
        %v207 = vld [vmem:[#allocation5 + $0x20] sm:$0xff]
        %v208 = vld [vmem:[#allocation5 + $0x28] sm:$0xff]
        %v209 = vld [vmem:[#allocation5 + $0x30] sm:$0xff]
        %v210 = vld [vmem:[#allocation5 + $0x38] sm:$0xff]
        %v211 = vld [vmem:[#allocation5 + $0x40] sm:$0xff]
        %v212 = vld [vmem:[#allocation5 + $0x48] sm:$0xff]
        %v213 = vld [vmem:[#allocation5 + $0x50] sm:$0xff]
        %v214 = vld [vmem:[#allocation5 + $0x58] sm:$0xff]
        %v215 = vld [vmem:[#allocation5 + $0x60] sm:$0xff]
        %v216 = vld [vmem:[#allocation5 + $0x68] sm:$0xff]
        %v217 = vld [vmem:[#allocation5 + $0x70] sm:$0xff]
        %v218 = vld [vmem:[#allocation5 + $0x78] sm:$0xff]
        %v219 = vld [vmem:[#allocation5 + $0x80] sm:$0xff]
        %v220 = vld [vmem:[#allocation5 + $0x88] sm:$0xff]
        %v221 = vld [vmem:[#allocation5 + $0x90] sm:$0xff]
        %v222 = vld [vmem:[#allocation5 + $0x98] sm:$0xff]
        %v223 = vld [vmem:[#allocation5 + $0xa0] sm:$0xff]
        %v224 = vld [vmem:[#allocation5 + $0xa8] sm:$0xff]
        %v225 = vld [vmem:[#allocation5 + $0xb0] sm:$0xff]
        %v226 = vld [vmem:[#allocation5 + $0xb8] sm:$0xff]
        %v227 = vld [vmem:[#allocation5 + $0xc0] sm:$0xff]
        %v228 = vld [vmem:[#allocation5 + $0xc8] sm:$0xff]
        %v229 = vld [vmem:[#allocation5 + $0xd0] sm:$0xff]
        %v230 = vld [vmem:[#allocation5 + $0xd8] sm:$0xff]
        %v231 = vld [vmem:[#allocation5 + $0xe0] sm:$0xff]
        %v232 = vld [vmem:[#allocation5 + $0xe8] sm:$0xff]
        %v233 = vld [vmem:[#allocation5 + $0xf0] sm:$0xff]
        %v234 = vld [vmem:[#allocation5 + $0xf8] sm:$0xff]
        %v235 = vld [vmem:[#allocation5 + $0x100] sm:$0xff]
        %v236 = vld [vmem:[#allocation5 + $0x108] sm:$0xff]
        %v237 = vld [vmem:[#allocation5 + $0x110] sm:$0xff]
        %v238 = vld [vmem:[#allocation5 + $0x118] sm:$0xff]
        %v239 = vld [vmem:[#allocation5 + $0x120] sm:$0xff]
        %v240 = vld [vmem:[#allocation5 + $0x128] sm:$0xff]
        %v241 = vld [vmem:[#allocation5 + $0x130] sm:$0xff]
        %v242 = vld [vmem:[#allocation5 + $0x138] sm:$0xff]
        %v243 = vld [vmem:[#allocation5 + $0x140] sm:$0xff]
        %v244 = vld [vmem:[#allocation5 + $0x148] sm:$0xff]
        %v245 = vld [vmem:[#allocation5 + $0x150] sm:$0xff]
        %v246 = vld [vmem:[#allocation5 + $0x158] sm:$0xff]
        %v247 = vld [vmem:[#allocation5 + $0x160] sm:$0xff]
        %v248 = vld [vmem:[#allocation5 + $0x168] sm:$0xff]
        %v249 = vld [vmem:[#allocation5 + $0x170] sm:$0xff]
        %v250 = vld [vmem:[#allocation5 + $0x178] sm:$0xff]
        %v251 = vld [vmem:[%s2] sm:$0x7]
        %v253 = vlaneseq
        %v254 = vshrl.u32 %v253, 7
        %v255 = vsub.s32 0, %v254
        %v256 = vrot.slane %v251, %v255
        %v257 = vlaneseq
        %v258 = vshrl.u32 %v257, 7
        %v259 = vsub.s32 1, %v258
        %v260 = vrot.slane %v251, %v259
        %v261 = vlaneseq
        %v262 = vshrl.u32 %v261, 7
        %v263 = vsub.s32 2, %v262
        %v264 = vrot.slane %v251, %v263
        %268 = vmatprep.subr.mxu0 %v204
        %269 = vmatpush1.msra.mxu0 %v203
        %270 = vmatprep.subr.mxu0 %v207
        %271 = vmatpush1.msra.mxu0 %v206
        %272 = vmatprep.subr.mxu0 %v210
        %273 = vmatpush1.msra.mxu0 %v209
        %274 = vmatprep.subr.mxu0 %v213
        %275 = vmatpush1.msra.mxu0 %v212
        %276 = vmatprep.subr.mxu0 %v216
        %277 = vmatpush1.msra.mxu0 %v215
        %278 = vmatprep.subr.mxu0 %v219
        %279 = vmatpush1.msra.mxu0 %v218
        %280 = vmatprep.subr.mxu0 %v222
        %281 = vmatpush1.msra.mxu0 %v221
        %282 = vmatprep.subr.mxu0 %v225
        %283 = vmatpush1.msra.mxu0 %v224
        %284 = vmatprep.subr.mxu0 %v228
        %285 = vmatpush1.msra.mxu0 %v227
        %286 = vmatprep.subr.mxu0 %v231
        %287 = vmatpush1.msra.mxu0 %v230
        %288 = vmatprep.subr.mxu0 %v234
        %289 = vmatpush1.msra.mxu0 %v233
        %290 = vmatprep.subr.mxu0 %v237
        %291 = vmatpush1.msra.mxu0 %v236
        %292 = vmatprep.subr.mxu0 %v240
        %293 = vmatpush1.msra.mxu0 %v239
        %294 = vmatprep.subr.mxu0 %v243
        %295 = vmatpush1.msra.mxu0 %v242
        %296 = vmatprep.subr.mxu0 %v246
        %297 = vmatpush1.msra.mxu0 %v245
        %298 = vmatprep.subr.mxu0 %v249
        %299 = vmatpush1.msra.mxu0 %v248
        %300 = vmatprep.subr.mxu0 0.0
        %301 = vmatpush1.msra.mxu0 0.0
        %302 = vmatprep.subr.mxu0 0.0
        %303 = vmatpush1.msra.mxu0 0.0
        %304 = vmatprep.subr.mxu0 0.0
        %305 = vmatpush1.msra.mxu0 0.0
        %306 = vmatprep.subr.mxu0 0.0
        %307 = vmatpush1.msra.mxu0 0.0
        %308 = vmatprep.subr.mxu0 0.0
        %309 = vmatpush1.msra.mxu0 0.0
        %310 = vmatprep.subr.mxu0 0.0
        %311 = vmatpush1.msra.mxu0 0.0
        %312 = vmatprep.subr.mxu0 0.0
        %313 = vmatpush1.msra.mxu0 0.0
        %314 = vmatprep.subr.mxu0 0.0
        %315 = vmatpush1.msra.mxu0 0.0
        %316 = vmatprep.subr.mxu0 0.0
        %317 = vmatpush1.msra.mxu0 0.0
        %318 = vmatprep.subr.mxu0 0.0
        %319 = vmatpush1.msra.mxu0 0.0
        %320 = vmatprep.subr.mxu0 0.0
        %321 = vmatpush1.msra.mxu0 0.0
        %322 = vmatprep.subr.mxu0 0.0
        %323 = vmatpush1.msra.mxu0 0.0
        %324 = vmatprep.subr.mxu0 0.0
        %325 = vmatpush1.msra.mxu0 0.0
        %326 = vmatprep.subr.mxu0 0.0
        %327 = vmatpush1.msra.mxu0 0.0
        %328 = vmatprep.subr.mxu0 0.0
        %329 = vmatpush1.msra.mxu0 0.0
        %330 = vmatprep.subr.mxu0 0.0
        %331 = vmatpush1.msra.mxu0 0.0
        %332 = vmatprep.mubr.f32.mxu0 0.0
        %333 = vmatmul.mubr.f32.gmra.mrb[0].mxu0 %v202
        %v334 = vpop.f32.mrb[0].mxu0
        %v335 = vadd.f32 %v256, %v334
        %v336 = vpop.f32.mrb[0].mxu0
        %v337 = vadd.f32 %v260, %v336
        %338 = vdwg.mxu0
        %339 = vmatprep.subr.mxu0 0.0
        %340 = vmatpush1.msra.mxu0 %v205
        %341 = vmatprep.subr.mxu0 0.0
        %342 = vmatpush1.msra.mxu0 %v208
        %343 = vmatprep.subr.mxu0 0.0
        %344 = vmatpush1.msra.mxu0 %v211
        %345 = vmatprep.subr.mxu0 0.0
        %346 = vmatpush1.msra.mxu0 %v214
        %347 = vmatprep.subr.mxu0 0.0
        %348 = vmatpush1.msra.mxu0 %v217
        %349 = vmatprep.subr.mxu0 0.0
        %350 = vmatpush1.msra.mxu0 %v220
        %351 = vmatprep.subr.mxu0 0.0
        %352 = vmatpush1.msra.mxu0 %v223
        %353 = vmatprep.subr.mxu0 0.0
        %354 = vmatpush1.msra.mxu0 %v226
        %355 = vmatprep.subr.mxu0 0.0
        %356 = vmatpush1.msra.mxu0 %v229
        %357 = vmatprep.subr.mxu0 0.0
        %358 = vmatpush1.msra.mxu0 %v232
        %359 = vmatprep.subr.mxu0 0.0
        %360 = vmatpush1.msra.mxu0 %v235
        %361 = vmatprep.subr.mxu0 0.0
        %362 = vmatpush1.msra.mxu0 %v238
        %363 = vmatprep.subr.mxu0 0.0
        %364 = vmatpush1.msra.mxu0 %v241
        %365 = vmatprep.subr.mxu0 0.0
        %366 = vmatpush1.msra.mxu0 %v244
        %367 = vmatprep.subr.mxu0 0.0
        %368 = vmatpush1.msra.mxu0 %v247
        %369 = vmatprep.subr.mxu0 0.0
        %370 = vmatpush1.msra.mxu0 %v250
        %371 = vmatprep.subr.mxu0 0.0
        %372 = vmatpush1.msra.mxu0 0.0
        %373 = vmatprep.subr.mxu0 0.0
        %374 = vmatpush1.msra.mxu0 0.0
        %375 = vmatprep.subr.mxu0 0.0
        %376 = vmatpush1.msra.mxu0 0.0
        %377 = vmatprep.subr.mxu0 0.0
        %378 = vmatpush1.msra.mxu0 0.0
        %379 = vmatprep.subr.mxu0 0.0
        %380 = vmatpush1.msra.mxu0 0.0
        %381 = vmatprep.subr.mxu0 0.0
        %382 = vmatpush1.msra.mxu0 0.0
        %383 = vmatprep.subr.mxu0 0.0
        %384 = vmatpush1.msra.mxu0 0.0
        %385 = vmatprep.subr.mxu0 0.0
        %386 = vmatpush1.msra.mxu0 0.0
        %387 = vmatprep.subr.mxu0 0.0
        %388 = vmatpush1.msra.mxu0 0.0
        %389 = vmatprep.subr.mxu0 0.0
        %390 = vmatpush1.msra.mxu0 0.0
        %391 = vmatprep.subr.mxu0 0.0
        %392 = vmatpush1.msra.mxu0 0.0
        %393 = vmatprep.subr.mxu0 0.0
        %394 = vmatpush1.msra.mxu0 0.0
        %395 = vmatprep.subr.mxu0 0.0
        %396 = vmatpush1.msra.mxu0 0.0
        %397 = vmatprep.subr.mxu0 0.0
        %398 = vmatpush1.msra.mxu0 0.0
        %399 = vmatprep.subr.mxu0 0.0
        %400 = vmatpush1.msra.mxu0 0.0
        %401 = vmatprep.subr.mxu0 0.0
        %402 = vmatpush1.msra.mxu0 0.0
        %403 = vmatprep.mubr.f32.mxu0 0.0
        %404 = vmatmul.mubr.f32.gmra.mrb[0].mxu0 %v202
        %v405 = vpop.f32.mrb[0].mxu0
        %v406 = vadd.f32 %v264, %v405
        %v407 = vpop.f32.mrb[0].mxu0
        %408 = vdwg.mxu0
        %v409 = vmax.f32 %v335, %v337
        %v410 = vmax.f32 %v409, %v406
        %411 = vst [vmem:[%s201] sm:$0xff] %v410
        %s412 = sand.u32 %s97, 1
        %s413 = scalar_lea.sflag [#allocation4], %s412
        %s414 = sand.u32 %s97, 1
        %s415 = smul.addr %s414, 8
        %s416 = scalar_lea.vmem [#allocation7], %s415
        // Predicated region
        $region41: #{tpu_custom_call.1} parent=31 // pred_check
          %p417 = pneg %p107
        $region42: #{tpu_custom_call.1} parent=31 // pred_check_branch
          %419 = sbr.rel (%p417) target = $region44
        $region43: #{tpu_custom_call.1} parent=31 // pred_region
          %s421 = ssub.s32 128, 128
          %422 = vsyncadd %s413, %s421
          %s423 = smul.addr %s21, 128
          %s424 = scalar_lea.hbm %s3, %s423
          %s426 = sshll.u32 %s416, 4
          %s427 = int_to_ptr.vmem [resolvable:$true] %s426
          %429 = dma.vmem_to_hbm [thread:$0]  %s427, 128, %s424, %s413
        $region44: #{tpu_custom_call.1} parent=31 // pred_fallthru
          _
      $region32: #{tpu_custom_call.1} parent=5 // pred_fallthru
        _
      %p430 = scmp.le.s32.totalorder 2, %s16
      // Predicated region
      $region45: #{tpu_custom_call.1} parent=5 // pred_check
        %p431 = pneg %p430
      $region46: #{tpu_custom_call.1} parent=5 // pred_check_branch
        %433 = sbr.rel (%p431) target = $region48
      $region47: #{tpu_custom_call.1} parent=5 // pred_region
        %s434 = ssub.s32 %s16, 2
        // Predicated region
        $region49: #{tpu_custom_call.1} parent=47 // pred_check
          %p435 = pneg %p113
        $region50: #{tpu_custom_call.1} parent=47 // pred_check_branch
          %437 = sbr.rel (%p435) target = $region52
        $region51: #{tpu_custom_call.1} parent=47 // pred_region
          %s438 = sand.u32 %s98, 1
          %s439 = scalar_lea.sflag [#allocation4], %s438
          %s440 = sand.u32 %s98, 1
          %s441 = smul.addr %s440, 8
          %s442 = scalar_lea.vmem [#allocation7], %s441
          %443 = dma.done %s439, 128
        $region52: #{tpu_custom_call.1} parent=47 // pred_fallthru
          _
      $region48: #{tpu_custom_call.1} parent=5 // pred_fallthru
        _
    $region6: #{tpu_custom_call.1} parent=1 // loop_footer
      %s20 = sadd.s32 1, %s16
    $region7: #{tpu_custom_call.1} parent=1 // loop_footer_branch
      %15 = sbr.rel target = $region3
    $region8: #{tpu_custom_call.1} parent=1 // loop_exit
      _
    %444 = vsyncpa [#allocation3], 1
    %s445 = scalar_lea.sflag [#allocation3], 1
    %446 = vsyncpa %s445, 1
    %447 = vsyncpa [#allocation6], 1
    %448 = vsyncpa [#allocation4], 1
    %s449 = scalar_lea.sflag [#allocation4], 1
    %450 = vsyncpa %s449, 1

</llo_original>
